<compile_context>
chip_gen: v5e
topology: v5e:2x2
jax: 0.10.0
libtpu: 0.0.40
codegen_flags: <defaults>
</compile_context>

<pallas_src>
import functools

import jax
import jax.numpy as jnp
from jax.experimental import pallas as pl
from jax.experimental.pallas import tpu as pltpu


def _round_up(x: int, m: int) -> int:
    return ((x + m - 1) // m) * m


def mlp_kernel(x_ref, w1_ref, w3_ref, w2_ref, o_ref, acc_ref):
    """Fused SwiGLU MLP, streaming over d_ff tiles.

    x_ref : (tm, d_model_p)        native dtype (resident across the d_ff axis)
    w1/w3 : (d_model_p, tff)       native dtype (streamed per d_ff tile)
    w2    : (tff, d_model_p)       native dtype (streamed per d_ff tile)
    o_ref : (tm, d_model_p)
    acc   : (tm, d_model_p) f32 scratch, persists across the d_ff grid axis.
    """
    k = pl.program_id(1)

    @pl.when(k == 0)
    def _init():
        acc_ref[...] = jnp.zeros_like(acc_ref)

    x = x_ref[...]  # keep native dtype; MXU accumulates in f32 below.

    h1 = jnp.dot(x, w1_ref[...], preferred_element_type=jnp.float32)  # (tm, tff) f32
    h3 = jnp.dot(x, w3_ref[...], preferred_element_type=jnp.float32)  # (tm, tff) f32

    # SiLU gate in f32 on this d_ff tile only (small; sigmoid -> EUP slot).
    gated = (h1 * jax.nn.sigmoid(h1)) * h3

    # Down-projection of this d_ff tile, accumulated into the f32 scratch.
    acc_ref[...] += jnp.dot(
        gated.astype(w2_ref.dtype), w2_ref[...], preferred_element_type=jnp.float32
    )

    @pl.when(k == pl.num_programs(1) - 1)
    def _finalize():
        o_ref[...] = acc_ref[...].astype(o_ref.dtype)


def _pick_tiles(M, d_model_p, d_ff, x_isz, w_isz, block_m, block_ff,
                vmem_budget=48 * 1024 * 1024):
    """Pick (tm, tff) so the double-buffered working set fits the VMEM budget."""
    tm = min(block_m, _round_up(M, 8))
    tff = min(block_ff, _round_up(d_ff, 128))
    while True:
        # x tile + out tile double-buffered, f32 accumulator (all independent of tff).
        fixed = 4 * tm * d_model_p * x_isz + tm * d_model_p * 4
        # W1 + W3 + W2 tiles, each double-buffered: 6 * d_model_p * tff * w_isz.
        per_tff = 6 * d_model_p * w_isz
        if fixed + per_tff * 128 <= vmem_budget or tm <= 8:
            tff_max = max(128, ((vmem_budget - fixed) // per_tff) // 128 * 128)
            tff = min(tff, tff_max)
            break
        tm = max(8, tm // 2)  # shrink the row tile if even tff=128 does not fit
    return tm, tff


@functools.partial(jax.jit, static_argnames=("block_m", "block_ff"))
def mlp_pallas(x, w1_t, w3_t, w2_t, *, block_m=256, block_ff=512):
    """x: (B, S, d_model). w1_t/w3_t: (d_model, d_ff). w2_t: (d_ff, d_model)."""
    B, S, d_model = x.shape
    d_ff = w1_t.shape[1]
    M = B * S
    x2d = x.reshape(M, d_model)

    x_isz = jnp.dtype(x.dtype).itemsize
    w_isz = jnp.dtype(w1_t.dtype).itemsize

    # --- tile selection + padding so every tile is (8, 128)-aligned -------------
    d_model_p = _round_up(d_model, 128)
    tm, tff = _pick_tiles(M, d_model_p, d_ff, x_isz, w_isz, block_m, block_ff)
    Mp = _round_up(M, tm)
    d_ff_p = _round_up(d_ff, tff)

    x_p = jnp.pad(x2d, ((0, Mp - M), (0, d_model_p - d_model)))
    w1_p = jnp.pad(w1_t, ((0, d_model_p - d_model), (0, d_ff_p - d_ff)))
    w3_p = jnp.pad(w3_t, ((0, d_model_p - d_model), (0, d_ff_p - d_ff)))
    w2_p = jnp.pad(w2_t, ((0, d_ff_p - d_ff), (0, d_model_p - d_model)))

    grid = (Mp // tm, d_ff_p // tff)  # reduction (d_ff) axis last

    # --- VMEM limit: double-buffered tiles + f32 accumulator, clamped for v7x ---
    vmem_need = (
        2 * tm * d_model_p * x_isz          # x tile (double-buffered)
        + 2 * 2 * d_model_p * tff * w_isz   # W1 + W3 tiles (double-buffered)
        + 2 * tff * d_model_p * w_isz       # W2 tile (double-buffered)
        + 2 * tm * d_model_p * x_isz        # output tile (double-buffered)
        + tm * d_model_p * 4                # f32 accumulator scratch
    )
    vmem_limit = min(max(int(vmem_need * 2), 32 * 1024 * 1024), 64 * 1024 * 1024)

    cost = pl.CostEstimate(
        flops=int(6 * M * d_model * d_ff),          # three M x d_model x d_ff matmuls
        transcendentals=int(M * d_ff),              # sigmoid in the gate
        bytes_accessed=int(
            3 * d_model * d_ff * w_isz              # W1, W3, W2 read once
            + 2 * M * d_model * x_isz               # x read + out written
        ),
    )

    out_p = pl.pallas_call(
        mlp_kernel,
        out_shape=jax.ShapeDtypeStruct((Mp, d_model_p), x.dtype),
        grid_spec=pltpu.PrefetchScalarGridSpec(
            num_scalar_prefetch=0,
            grid=grid,
            in_specs=[
                pl.BlockSpec((tm, d_model_p), lambda i, k: (i, 0)),   # x rows (resident over k)
                pl.BlockSpec((d_model_p, tff), lambda i, k: (0, k)),  # W1 d_ff tile
                pl.BlockSpec((d_model_p, tff), lambda i, k: (0, k)),  # W3 d_ff tile
                pl.BlockSpec((tff, d_model_p), lambda i, k: (k, 0)),  # W2 d_ff tile
            ],
            out_specs=pl.BlockSpec((tm, d_model_p), lambda i, k: (i, 0)),
            scratch_shapes=[pltpu.VMEM((tm, d_model_p), jnp.float32)],
        ),
        compiler_params=pltpu.CompilerParams(
            dimension_semantics=("parallel", "arbitrary"),
            vmem_limit_bytes=vmem_limit,
        ),
        cost_estimate=cost,
    )(x_p, w1_p, w3_p, w2_p)

    return out_p[:M, :d_model].reshape(B, S, d_model)


def mlp_reference(x, w1_t, w3_t, w2_t):
    h1 = x @ w1_t
    h3 = x @ w3_t
    gated = jax.nn.silu(h1) * h3
    return gated @ w2_t


if __name__ == "__main__":
    # Small config consistent with TransformerConfig: d_model=32, d_ff=4*d_model=128.
    batch, seq, d_model = 2, 8, 32
    d_ff = 4 * d_model

    key = jax.random.PRNGKey(0)
    kx, k1, k2, k3 = jax.random.split(key, 4)

    x = jax.random.normal(kx, (batch, seq, d_model), dtype=jnp.float32)

    # nn.Linear weight shapes: fc_1 (d_ff, d_model), fc_2 (d_model, d_ff), fc_3 (d_ff, d_model).
    std = 0.02
    w1 = std * jax.random.normal(k1, (d_ff, d_model), dtype=jnp.float32)   # fc_1.weight
    w2 = std * jax.random.normal(k2, (d_model, d_ff), dtype=jnp.float32)   # fc_2.weight
    w3 = std * jax.random.normal(k3, (d_ff, d_model), dtype=jnp.float32)   # fc_3.weight

    w1_t, w2_t, w3_t = w1.T, w2.T, w3.T   # (d_in, d_out) layout for the kernel

    out = mlp_pallas(x, w1_t, w3_t, w2_t)
    out = jax.block_until_ready(out)

    ref = mlp_reference(x, w1_t, w3_t, w2_t)
    assert out.shape == (batch, seq, d_model)
    assert jnp.allclose(out, ref, atol=1e-5, rtol=1e-5), "mismatch vs reference"

    print("KERNEL_OK")
</pallas_src>

<mosaic_0001>
module attributes {stable_mosaic.version = 11 : i64} {
  func.func @mlp_kernel(%arg0: i32, %arg1: i32, %arg2: memref<16x128xf32, #tpu.memory_space<vmem>>, %arg3: memref<128x128xf32, #tpu.memory_space<vmem>>, %arg4: memref<128x128xf32, #tpu.memory_space<vmem>>, %arg5: memref<128x128xf32, #tpu.memory_space<vmem>>, %arg6: memref<16x128xf32, #tpu.memory_space<vmem>>, %arg7: memref<16x128xf32, #tpu.memory_space<vmem>>) attributes {dimension_semantics = [#tpu.dimension_semantics<parallel>, #tpu.dimension_semantics<arbitrary>], iteration_bounds = array<i64: 1, 1>, scalar_prefetch = 0 : i64, scratch_operands = 1 : i64, tpu.core_type = #tpu.core_type<tc>, window_params = [{transform_indices = @transform_0, window_bounds = array<i64: 16, 128>}, {transform_indices = @transform_1, window_bounds = array<i64: 128, 128>}, {transform_indices = @transform_2, window_bounds = array<i64: 128, 128>}, {transform_indices = @transform_3, window_bounds = array<i64: 128, 128>}, {transform_indices = @transform_4, window_bounds = array<i64: 16, 128>}]} {
    %c0_i32 = arith.constant 0 : i32
    %0 = arith.cmpi eq, %arg1, %c0_i32 : i32
    %1 = arith.extui %0 : i1 to i32
    %c0_i32_0 = arith.constant 0 : i32
    %2 = arith.cmpi ne, %1, %c0_i32_0 : i32
    scf.if %2 {
      %cst_17 = arith.constant 0.000000e+00 : f32
      %23 = vector.broadcast %cst_17 : f32 to vector<16x128xf32>
      %c0_18 = arith.constant 0 : index
      %c0_19 = arith.constant 0 : index
      %24 = vector.load %arg7[%c0_18, %c0_19] : memref<16x128xf32, #tpu.memory_space<vmem>>, vector<16x128xf32>
      tpu.vector_store %arg7[%c0_18, %c0_19], %23 {strides = array<i32>} : memref<16x128xf32, #tpu.memory_space<vmem>>, vector<16x128xf32>,
    } else {
    }
    %c0 = arith.constant 0 : index
    %c0_1 = arith.constant 0 : index
    %3 = vector.load %arg2[%c0, %c0_1] : memref<16x128xf32, #tpu.memory_space<vmem>>, vector<16x128xf32>
    %c0_2 = arith.constant 0 : index
    %c0_3 = arith.constant 0 : index
    %4 = vector.load %arg3[%c0_2, %c0_3] : memref<128x128xf32, #tpu.memory_space<vmem>>, vector<128x128xf32>
    %cst = arith.constant dense<0.000000e+00> : vector<16x128xf32>
    %5 = tpu.matmul %3, %4, %cst {dimension_numbers = #tpu.dot_dimension_numbers<[1], [0], [0], [1], [0, 0, 1, 1], [], []>} : vector<16x128xf32>, vector<128x128xf32>, vector<16x128xf32> -> vector<16x128xf32>
    %c0_4 = arith.constant 0 : index
    %c0_5 = arith.constant 0 : index
    %6 = vector.load %arg4[%c0_4, %c0_5] : memref<128x128xf32, #tpu.memory_space<vmem>>, vector<128x128xf32>
    %cst_6 = arith.constant dense<0.000000e+00> : vector<16x128xf32>
    %7 = tpu.matmul %3, %6, %cst_6 {dimension_numbers = #tpu.dot_dimension_numbers<[1], [0], [0], [1], [0, 0, 1, 1], [], []>} : vector<16x128xf32>, vector<128x128xf32>, vector<16x128xf32> -> vector<16x128xf32>
    %8 = arith.negf %5 : vector<16x128xf32>
    %9 = math.exp %8 : vector<16x128xf32>
    %cst_7 = arith.constant 1.000000e+00 : f32
    %10 = vector.broadcast %cst_7 : f32 to vector<16x128xf32>
    %11 = arith.addf %10, %9 : vector<16x128xf32>
    %12 = arith.divf %10, %11 : vector<16x128xf32>
    %13 = arith.mulf %5, %12 : vector<16x128xf32>
    %14 = arith.mulf %13, %7 : vector<16x128xf32>
    %c0_8 = arith.constant 0 : index
    %c0_9 = arith.constant 0 : index
    %15 = vector.load %arg7[%c0_8, %c0_9] : memref<16x128xf32, #tpu.memory_space<vmem>>, vector<16x128xf32>
    %c0_10 = arith.constant 0 : index
    %c0_11 = arith.constant 0 : index
    %16 = vector.load %arg5[%c0_10, %c0_11] : memref<128x128xf32, #tpu.memory_space<vmem>>, vector<128x128xf32>
    %cst_12 = arith.constant dense<0.000000e+00> : vector<16x128xf32>
    %17 = tpu.matmul %14, %16, %cst_12 {dimension_numbers = #tpu.dot_dimension_numbers<[1], [0], [0], [1], [0, 0, 1, 1], [], []>} : vector<16x128xf32>, vector<128x128xf32>, vector<16x128xf32> -> vector<16x128xf32>
    %18 = arith.addf %15, %17 : vector<16x128xf32>
    %c0_13 = arith.constant 0 : index
    %c0_14 = arith.constant 0 : index
    %19 = vector.load %arg7[%c0_13, %c0_14] : memref<16x128xf32, #tpu.memory_space<vmem>>, vector<16x128xf32>
    tpu.vector_store %arg7[%c0_13, %c0_14], %18 {strides = array<i32>} : memref<16x128xf32, #tpu.memory_space<vmem>>, vector<16x128xf32>,
    %c0_i32_15 = arith.constant 0 : i32
    %20 = arith.cmpi eq, %arg1, %c0_i32_15 : i32
    %21 = arith.extui %20 : i1 to i32
    %c0_i32_16 = arith.constant 0 : i32
    %22 = arith.cmpi ne, %21, %c0_i32_16 : i32
    scf.if %22 {
      %c0_17 = arith.constant 0 : index
      %c0_18 = arith.constant 0 : index
      %23 = vector.load %arg7[%c0_17, %c0_18] : memref<16x128xf32, #tpu.memory_space<vmem>>, vector<16x128xf32>
      %c0_19 = arith.constant 0 : index
      %c0_20 = arith.constant 0 : index
      %24 = vector.load %arg6[%c0_19, %c0_20] : memref<16x128xf32, #tpu.memory_space<vmem>>, vector<16x128xf32>
      tpu.vector_store %arg6[%c0_19, %c0_20], %23 {strides = array<i32>} : memref<16x128xf32, #tpu.memory_space<vmem>>, vector<16x128xf32>,
    } else {
    }
    return
  }
  func.func @transform_0(%arg0: i32, %arg1: i32) -> (i32, i32) {
    %c0_i32 = arith.constant 0 : i32
    %c0_i32_0 = arith.constant 0 : i32
    return %arg0, %c0_i32 : i32, i32
  }
  func.func @transform_1(%arg0: i32, %arg1: i32) -> (i32, i32) {
    %c0_i32 = arith.constant 0 : i32
    %c0_i32_0 = arith.constant 0 : i32
    return %c0_i32, %arg1 : i32, i32
  }
  func.func @transform_2(%arg0: i32, %arg1: i32) -> (i32, i32) {
    %c0_i32 = arith.constant 0 : i32
    %c0_i32_0 = arith.constant 0 : i32
    return %c0_i32, %arg1 : i32, i32
  }
  func.func @transform_3(%arg0: i32, %arg1: i32) -> (i32, i32) {
    %c0_i32 = arith.constant 0 : i32
    %c0_i32_0 = arith.constant 0 : i32
    return %arg1, %c0_i32 : i32, i32
  }
  func.func @transform_4(%arg0: i32, %arg1: i32) -> (i32, i32) {
    %c0_i32 = arith.constant 0 : i32
    %c0_i32_0 = arith.constant 0 : i32
    return %arg0, %c0_i32 : i32, i32
  }
}

</mosaic_0001>

<llo_original>
// kernel: mlp_pallas.1
$region0: #{mlp_pallas.1}
  #allocation0 [shape = 'u32[]', space=smem, size = 0x4, offset = 0x4, fixed_abs, tag = 'smem constant byte address 0x4 - core index']
  #allocation1 [shape = 'u32[72,128]{1,0:T(1,128)}', space=vmem, size = 0x9000, scoped, tag = 'internal scratch']
  #allocation2 [shape = 'f32[16,128]{1,0:T(8,128)}', space=vmem, size = 0x2000, scoped, tag = 'scratch operand']
  %s0 = inlined_call_operand.vmem [shape: f32[16,128], index: 0, kind: input, shape index: {}]
  %s1 = inlined_call_operand.vmem [shape: f32[128,128], index: 1, kind: input, shape index: {}]
  %s2 = inlined_call_operand.vmem [shape: f32[128,128], index: 2, kind: input, shape index: {}]
  %s3 = inlined_call_operand.vmem [shape: f32[128,128], index: 3, kind: input, shape index: {}]
  %s4 = inlined_call_operand.vmem [shape: f32[16,128], index: 4, kind: output, shape index: {}]
  %s5 = sld [smem:[#allocation0]]
  $region34: #{mlp_pallas.1} parent=0
    _
  %s7 = ssub.s32 1, %s5
  %s8 = scalar_select 0, %s7, %s5
  // Predicated region
  $region2: #{mlp_pallas.1} parent=0 // pred_check
    _
  $region3: #{mlp_pallas.1} parent=0 // pred_check_branch
    %10 = sbr.rel (0) target = $region5
  $region4: #{mlp_pallas.1} parent=0 // pred_region
    _
  $region5: #{mlp_pallas.1} parent=0 // pred_fallthru
    _
  // Predicated region
  $region6: #{mlp_pallas.1} parent=0 // pred_check
    _
  $region7: #{mlp_pallas.1} parent=0 // pred_check_branch
    %12 = sbr.rel (0) target = $region9
  $region8: #{mlp_pallas.1} parent=0 // pred_region
    _
  $region9: #{mlp_pallas.1} parent=0 // pred_fallthru
    _
  // Predicated region
  $region10: #{mlp_pallas.1} parent=0 // pred_check
    _
  $region11: #{mlp_pallas.1} parent=0 // pred_check_branch
    %14 = sbr.rel (0) target = $region13
  $region12: #{mlp_pallas.1} parent=0 // pred_region
    _
  $region13: #{mlp_pallas.1} parent=0 // pred_fallthru
    _
  // Predicated region
  $region14: #{mlp_pallas.1} parent=0 // pred_check
    _
  $region15: #{mlp_pallas.1} parent=0 // pred_check_branch
    %16 = sbr.rel (0) target = $region17
  $region16: #{mlp_pallas.1} parent=0 // pred_region
    _
  $region17: #{mlp_pallas.1} parent=0 // pred_fallthru
    _
  %p17 = scmp.eq.s32.totalorder 0, 0
  // Predicated region
  $region18: #{mlp_pallas.1} parent=0 // pred_check
    %p18 = pneg %p17
  $region19: #{mlp_pallas.1} parent=0 // pred_check_branch
    %20 = sbr.rel (%p18) target = $region21
  $region20: #{mlp_pallas.1} parent=0 // pred_region
    %21 = vst [vmem:[#allocation2] sm:$0xff] 0.0
    %22 = vst [vmem:[#allocation2 + $0x8] sm:$0xff] 0.0
  $region21: #{mlp_pallas.1} parent=0 // pred_fallthru
    _
  %v23 = vld [vmem:[%s0] sm:$0xff]
  %v24 = vld [vmem:[%s0 + $0x8] sm:$0xff]
  %v25 = vld [vmem:[%s1] sm:$0xff]
  %v26 = vld [vmem:[%s1 + $0x8] sm:$0xff]
  %v27 = vld [vmem:[%s1 + $0x10] sm:$0xff]
  %v28 = vld [vmem:[%s1 + $0x18] sm:$0xff]
  %v29 = vld [vmem:[%s1 + $0x20] sm:$0xff]
  %v30 = vld [vmem:[%s1 + $0x28] sm:$0xff]
  %v31 = vld [vmem:[%s1 + $0x30] sm:$0xff]
  %v32 = vld [vmem:[%s1 + $0x38] sm:$0xff]
  %v33 = vld [vmem:[%s1 + $0x40] sm:$0xff]
  %v34 = vld [vmem:[%s1 + $0x48] sm:$0xff]
  %v35 = vld [vmem:[%s1 + $0x50] sm:$0xff]
  %v36 = vld [vmem:[%s1 + $0x58] sm:$0xff]
  %v37 = vld [vmem:[%s1 + $0x60] sm:$0xff]
  %v38 = vld [vmem:[%s1 + $0x68] sm:$0xff]
  %v39 = vld [vmem:[%s1 + $0x70] sm:$0xff]
  %v40 = vld [vmem:[%s1 + $0x78] sm:$0xff]
  %41 = vmatpush.msra.mxu0 %v40
  %42 = vmatpush.msra.mxu0 %v39
  %43 = vmatpush.msra.mxu0 %v38
  %44 = vmatpush.msra.mxu0 %v37
  %45 = vmatpush.msra.mxu0 %v36
  %46 = vmatpush.msra.mxu0 %v35
  %47 = vmatpush.msra.mxu0 %v34
  %48 = vmatpush.msra.mxu0 %v33
  %49 = vmatpush.msra.mxu0 %v32
  %50 = vmatpush.msra.mxu0 %v31
  %51 = vmatpush.msra.mxu0 %v30
  %52 = vmatpush.msra.mxu0 %v29
  %53 = vmatpush.msra.mxu0 %v28
  %54 = vmatpush.msra.mxu0 %v27
  %55 = vmatpush.msra.mxu0 %v26
  %56 = vmatpush.msra.mxu0 %v25
  %57 = vmatmul.f32.gmra.mxu0 %v23
  %v58 = vpop.f32.mrf.mxu0
  %v59 = vadd.f32 0.0, %v58
  %60 = vmatmul.f32.gmra.mxu0 %v24
  %v61 = vpop.f32.mrf.mxu0
  %v62 = vadd.f32 0.0, %v61
  %63 = vdwg.mxu0
  %v64 = vld [vmem:[%s2] sm:$0xff]
  %v65 = vld [vmem:[%s2 + $0x8] sm:$0xff]
  %v66 = vld [vmem:[%s2 + $0x10] sm:$0xff]
  %v67 = vld [vmem:[%s2 + $0x18] sm:$0xff]
  %v68 = vld [vmem:[%s2 + $0x20] sm:$0xff]
  %v69 = vld [vmem:[%s2 + $0x28] sm:$0xff]
  %v70 = vld [vmem:[%s2 + $0x30] sm:$0xff]
  %v71 = vld [vmem:[%s2 + $0x38] sm:$0xff]
  %v72 = vld [vmem:[%s2 + $0x40] sm:$0xff]
  %v73 = vld [vmem:[%s2 + $0x48] sm:$0xff]
  %v74 = vld [vmem:[%s2 + $0x50] sm:$0xff]
  %v75 = vld [vmem:[%s2 + $0x58] sm:$0xff]
  %v76 = vld [vmem:[%s2 + $0x60] sm:$0xff]
  %v77 = vld [vmem:[%s2 + $0x68] sm:$0xff]
  %v78 = vld [vmem:[%s2 + $0x70] sm:$0xff]
  %v79 = vld [vmem:[%s2 + $0x78] sm:$0xff]
  %80 = vmatpush.msra.mxu0 %v79
  %81 = vmatpush.msra.mxu0 %v78
  %82 = vmatpush.msra.mxu0 %v77
  %83 = vmatpush.msra.mxu0 %v76
  %84 = vmatpush.msra.mxu0 %v75
  %85 = vmatpush.msra.mxu0 %v74
  %86 = vmatpush.msra.mxu0 %v73
  %87 = vmatpush.msra.mxu0 %v72
  %88 = vmatpush.msra.mxu0 %v71
  %89 = vmatpush.msra.mxu0 %v70
  %90 = vmatpush.msra.mxu0 %v69
  %91 = vmatpush.msra.mxu0 %v68
  %92 = vmatpush.msra.mxu0 %v67
  %93 = vmatpush.msra.mxu0 %v66
  %94 = vmatpush.msra.mxu0 %v65
  %95 = vmatpush.msra.mxu0 %v64
  %96 = vmatmul.f32.gmra.mxu0 %v23
  %v97 = vpop.f32.mrf.mxu0
  %v98 = vadd.f32 0.0, %v97
  %99 = vmatmul.f32.gmra.mxu0 %v24
  %v100 = vpop.f32.mrf.mxu0
  %v101 = vadd.f32 0.0, %v100
  %102 = vdwg.mxu0
  %v103 = vxor.u32 %v59, 2147483648
  %v104 = vxor.u32 %v62, 2147483648
  %v105 = vmul.f32 %v103, 1.442695
  %v106 = vpow.pop %v105
  %v107 = vmul.f32 %v104, 1.442695
  %v108 = vpow.pop %v107
  %v109 = vadd.f32 %v106, 1.0
  %v110 = vadd.f32 %v108, 1.0
  %v111 = vrcp.pop %v109
  %v112 = vmul.f32 %v109, %v111
  %v113 = vsub.f32 1.0, %v112
  %v114 = vmul.f32 %v111, %v113
  %v115 = vadd.f32 %v111, %v114
  %vm116 = vweird.f32 %v109
  %vm117 = vweird.f32 %v111
  %vm118 = vmor %vm116, %vm117
  %v119 = vsel %vm118, %v111, %v115
  %v120 = vand.u32 2147483647, %v109
  %vm121 = vcmp.eq.f32.partialorder %v120, 8.507059e+37
  %v122 = vand.u32 %v109, 2147483648
  %v123 = vor.u32 1.1754944e-38, %v122
  %v124 = vsel %vm121, %v123, %v119
  %v125 = vmul.f32 1.0, %v124
  %v126 = vrcp.pop %v110
  %v127 = vmul.f32 %v110, %v126
  %v128 = vsub.f32 1.0, %v127
  %v129 = vmul.f32 %v126, %v128
  %v130 = vadd.f32 %v126, %v129
  %vm131 = vweird.f32 %v110
  %vm132 = vweird.f32 %v126
  %vm133 = vmor %vm131, %vm132
  %v134 = vsel %vm133, %v126, %v130
  %v135 = vand.u32 2147483647, %v110
  %vm136 = vcmp.eq.f32.partialorder %v135, 8.507059e+37
  %v137 = vand.u32 %v110, 2147483648
  %v138 = vor.u32 1.1754944e-38, %v137
  %v139 = vsel %vm136, %v138, %v134
  %v140 = vmul.f32 1.0, %v139
  %v141 = vmul.f32 %v59, %v125
  %v142 = vmul.f32 %v62, %v140
  %v143 = vmul.f32 %v141, %v98
  %v144 = vmul.f32 %v142, %v101
  %v145 = vld [vmem:[#allocation2] sm:$0xff]
  %v146 = vld [vmem:[#allocation2 + $0x8] sm:$0xff]
  %v147 = vld [vmem:[%s3] sm:$0xff]
  %v148 = vld [vmem:[%s3 + $0x8] sm:$0xff]
  %v149 = vld [vmem:[%s3 + $0x10] sm:$0xff]
  %v150 = vld [vmem:[%s3 + $0x18] sm:$0xff]
  %v151 = vld [vmem:[%s3 + $0x20] sm:$0xff]
  %v152 = vld [vmem:[%s3 + $0x28] sm:$0xff]
  %v153 = vld [vmem:[%s3 + $0x30] sm:$0xff]
  %v154 = vld [vmem:[%s3 + $0x38] sm:$0xff]
  %v155 = vld [vmem:[%s3 + $0x40] sm:$0xff]
  %v156 = vld [vmem:[%s3 + $0x48] sm:$0xff]
  %v157 = vld [vmem:[%s3 + $0x50] sm:$0xff]
  %v158 = vld [vmem:[%s3 + $0x58] sm:$0xff]
  %v159 = vld [vmem:[%s3 + $0x60] sm:$0xff]
  %v160 = vld [vmem:[%s3 + $0x68] sm:$0xff]
  %v161 = vld [vmem:[%s3 + $0x70] sm:$0xff]
  %v162 = vld [vmem:[%s3 + $0x78] sm:$0xff]
  %163 = vmatpush.msra.mxu0 %v162
  %164 = vmatpush.msra.mxu0 %v161
  %165 = vmatpush.msra.mxu0 %v160
  %166 = vmatpush.msra.mxu0 %v159
  %167 = vmatpush.msra.mxu0 %v158
  %168 = vmatpush.msra.mxu0 %v157
  %169 = vmatpush.msra.mxu0 %v156
  %170 = vmatpush.msra.mxu0 %v155
  %171 = vmatpush.msra.mxu0 %v154
  %172 = vmatpush.msra.mxu0 %v153
  %173 = vmatpush.msra.mxu0 %v152
  %174 = vmatpush.msra.mxu0 %v151
  %175 = vmatpush.msra.mxu0 %v150
  %176 = vmatpush.msra.mxu0 %v149
  %177 = vmatpush.msra.mxu0 %v148
  %178 = vmatpush.msra.mxu0 %v147
  %179 = vmatmul.f32.gmra.mxu0 %v143
  %v180 = vpop.f32.mrf.mxu0
  %v181 = vadd.f32 0.0, %v180
  %182 = vmatmul.f32.gmra.mxu0 %v144
  %v183 = vpop.f32.mrf.mxu0
  %v184 = vadd.f32 0.0, %v183
  %185 = vdwg.mxu0
  %v186 = vadd.f32 %v145, %v181
  %v187 = vadd.f32 %v146, %v184
  %188 = vst [vmem:[#allocation2] sm:$0xff] %v186
  %189 = vst [vmem:[#allocation2 + $0x8] sm:$0xff] %v187
  // Predicated region
  $region22: #{mlp_pallas.1} parent=0 // pred_check
    %p190 = pneg %p17
  $region23: #{mlp_pallas.1} parent=0 // pred_check_branch
    %192 = sbr.rel (%p190) target = $region25
  $region24: #{mlp_pallas.1} parent=0 // pred_region
    %v193 = vld [vmem:[#allocation2] sm:$0xff]
    %v194 = vld [vmem:[#allocation2 + $0x8] sm:$0xff]
    %195 = vst [vmem:[%s4] sm:$0xff] %v193
    %196 = vst [vmem:[%s4 + $0x8] sm:$0xff] %v194
  $region25: #{mlp_pallas.1} parent=0 // pred_fallthru
    _
  // Predicated region
  $region26: #{mlp_pallas.1} parent=0 // pred_check
    _
  $region27: #{mlp_pallas.1} parent=0 // pred_check_branch
    %198 = sbr.rel (0) target = $region29
  $region28: #{mlp_pallas.1} parent=0 // pred_region
    _
  $region29: #{mlp_pallas.1} parent=0 // pred_fallthru
    _
  // Predicated region
  $region30: #{mlp_pallas.1} parent=0 // pred_check
    _
  $region31: #{mlp_pallas.1} parent=0 // pred_check_branch
    %200 = sbr.rel (0) target = $region33
  $region32: #{mlp_pallas.1} parent=0 // pred_region
    _
  $region33: #{mlp_pallas.1} parent=0 // pred_fallthru
    _

</llo_original>
